<compile_context>
chip_gen: v7x
topology: tpu7x:2x2x1
jax: 0.10.0
libtpu: 0.0.40
codegen_flags: <defaults>
</compile_context>

<pallas_src>
import functools

import jax
import jax.numpy as jnp
from jax.experimental import pallas as pl
from jax.experimental.pallas import tpu as pltpu


def _round_up(v, m):
    return (v + m - 1) // m * m


def _pad_to(x, shape):
    return jnp.pad(x, [(0, t - s) for s, t in zip(x.shape, shape)])


def _vmem_limit_bytes():
    # Generation-aware scoped-VMEM limit: ~75% of physical per-core VMEM
    # (48 MiB on v7x, 96 MiB on v5e/v6e). Actual need after the tiling changes
    # is only a few MB, so this just leaves headroom for compiler scratch.
    try:
        cap = pltpu.get_tpu_info().vmem_capacity_bytes
    except Exception:
        cap = 64 << 20
    return int(cap * 3 // 4)


# --------------------------------------------------------------------------
# Kernel 1: fused per-node dense transform
#   [S | Z] = X @ [W_self | W_agg]  (one 2*hp-wide MXU matmul), S += bias
# --------------------------------------------------------------------------
def _xform_kernel(x_ref, w_ref, b_ref, s_ref, z_ref, *, hp):
    out = jnp.dot(x_ref[...], w_ref[...], preferred_element_type=jnp.float32)
    # Split at lane hp (multiple of 128) -> layout-free slices.
    s_ref[...] = (out[:, :hp] + b_ref[...]).astype(s_ref.dtype)
    z_ref[...] = out[:, hp:].astype(z_ref.dtype)


def pgcn_xform(x, w_cat, b, *, tm):
    n, f = x.shape
    hp2 = w_cat.shape[1]
    hp = hp2 // 2
    assert n % tm == 0, (n, tm)
    kernel = functools.partial(_xform_kernel, hp=hp)
    return pl.pallas_call(
        kernel,
        grid=(n // tm,),
        in_specs=[
            pl.BlockSpec((tm, f), lambda i: (i, 0)),     # X row tile (streams)
            pl.BlockSpec((f, hp2), lambda i: (0, 0)),    # [W_self | W_agg] (resident)
            pl.BlockSpec((1, hp), lambda i: (0, 0)),     # bias (resident)
        ],
        out_specs=[
            pl.BlockSpec((tm, hp), lambda i: (i, 0)),
            pl.BlockSpec((tm, hp), lambda i: (i, 0)),
        ],
        out_shape=[
            jax.ShapeDtypeStruct((n, hp), jnp.float32),    # S = X @ W_self + b
            jax.ShapeDtypeStruct((n, hp), jnp.bfloat16),   # Z = X @ W_agg
        ],
        compiler_params=pltpu.CompilerParams(
            dimension_semantics=("parallel",),
            vmem_limit_bytes=_vmem_limit_bytes()),
    )(x, w_cat, b)


# --------------------------------------------------------------------------
# Kernel 2: tiled aggregation   out = act(A_hat @ Z + S) [* dropout_mask]
#   A_hat streams (tm, tk) tiles; Z is fully VMEM-resident and sliced in-kernel.
# --------------------------------------------------------------------------
def _agg_kernel(*refs, apply_relu, has_mask, tk):
    if has_mask:
        a_ref, z_ref, s_ref, mask_ref, o_ref, acc_ref = refs
    else:
        a_ref, z_ref, s_ref, o_ref, acc_ref = refs
        mask_ref = None
    k = pl.program_id(1)

    @pl.when(k == 0)
    def _init():
        acc_ref[...] = jnp.zeros_like(acc_ref)

    start = pl.multiple_of(k * tk, tk)
    z_blk = z_ref[pl.ds(start, tk), :]       # resident Z, no per-i re-DMA
    acc_ref[...] += jnp.dot(a_ref[...], z_blk,
                            preferred_element_type=jnp.float32)

    @pl.when(k == pl.num_programs(1) - 1)
    def _epilogue():
        h = acc_ref[...] + s_ref[...]
        if apply_relu:
            h = jnp.maximum(h, 0.0)
        if has_mask:
            h = h * mask_ref[...].astype(jnp.float32)
        o_ref[...] = h.astype(o_ref.dtype)


def pgcn_aggregate(a_hat, z, s, mask, *, apply_relu, out_dtype, tm, tk):
    n, n_k = a_hat.shape
    hp = z.shape[1]
    # Guard against silent truncation of the reduction if tm/tk diverge from
    # the padding tile.
    assert n % tm == 0 and n_k % tk == 0, (n, n_k, tm, tk)
    assert z.shape[0] == n_k
    has_mask = mask is not None
    kernel = functools.partial(_agg_kernel, apply_relu=apply_relu,
                               has_mask=has_mask, tk=tk)
    in_specs = [
        pl.BlockSpec((tm, tk), lambda i, k: (i, k)),     # A_hat tile (streams)
        pl.BlockSpec((n_k, hp), lambda i, k: (0, 0)),    # Z (fully resident)
        pl.BlockSpec((tm, hp), lambda i, k: (i, 0)),     # S row block (epilogue)
    ]
    args = [a_hat, z, s]
    if has_mask:
        in_specs.append(pl.BlockSpec((tm, hp), lambda i, k: (i, 0)))  # bf16 mask
        args.append(mask)
    return pl.pallas_call(
        kernel,
        grid=(n // tm, n_k // tk),
        in_specs=in_specs,
        out_specs=pl.BlockSpec((tm, hp), lambda i, k: (i, 0)),
        out_shape=jax.ShapeDtypeStruct((n, hp), out_dtype),
        scratch_shapes=[pltpu.VMEM((tm, hp), jnp.float32)],
        compiler_params=pltpu.CompilerParams(
            dimension_semantics=("parallel", "arbitrary"),
            vmem_limit_bytes=_vmem_limit_bytes()),
    )(*args)


# --------------------------------------------------------------------------
# One-time preparation (padding + bf16 casts hoisted out of the forward)
# --------------------------------------------------------------------------
def pgcn_prepare(x, a_hat, params, dropout_mask, *, tile=512):
    # NOTE (v7x): prefer a `tile` that makes n_p / tile even so the "parallel"
    # row axis splits evenly across the two TensorCores.
    n, f = x.shape
    h = params["w1_self"].shape[1]
    c = params["w2_self"].shape[1]
    n_p = _round_up(n, tile)
    f_p = _round_up(f, 128)
    h_p = _round_up(h, 128)
    c_p = _round_up(c, 128)

    # Fused [W_self | W_agg] weights per layer -> one 2*hp-wide MXU matmul.
    w1_cat = jnp.concatenate(
        [_pad_to(params["w1_self"], (f_p, h_p)),
         _pad_to(params["w1_agg"], (f_p, h_p))], axis=1).astype(jnp.bfloat16)
    w2_cat = jnp.concatenate(
        [_pad_to(params["w2_self"], (h_p, c_p)),
         _pad_to(params["w2_agg"], (h_p, c_p))], axis=1).astype(jnp.bfloat16)

    return dict(
        n=n, c=c, tile=tile,
        x=_pad_to(x, (n_p, f_p)).astype(jnp.bfloat16),
        a_hat=_pad_to(a_hat, (n_p, n_p)).astype(jnp.bfloat16),
        mask=_pad_to(dropout_mask, (n_p, h_p)).astype(jnp.bfloat16),  # 0.0/2.0 exact
        w1_cat=w1_cat,
        b1=_pad_to(params["b1"], (h_p,)).reshape(1, h_p).astype(jnp.float32),
        w2_cat=w2_cat,
        b2=_pad_to(params["b2"], (c_p,)).reshape(1, c_p).astype(jnp.float32),
    )


# --------------------------------------------------------------------------
# Full forward pass (kernels only; all padding/casting done in pgcn_prepare)
# --------------------------------------------------------------------------
def pgcn_forward(prep):
    tile = prep["tile"]

    # linmaps1: identity (first-order singleton reference domains)
    # Layer 1: fused transform, aggregate, relu, dropout (bf16 output)
    s1, z1 = pgcn_xform(prep["x"], prep["w1_cat"], prep["b1"], tm=tile)
    h1 = pgcn_aggregate(prep["a_hat"], z1, s1, prep["mask"],
                        apply_relu=True, out_dtype=jnp.bfloat16,
                        tm=tile, tk=tile)

    # Layer 2: fused transform, aggregate (no activation, no dropout)
    s2, z2 = pgcn_xform(h1, prep["w2_cat"], prep["b2"], tm=tile)
    out_p = pgcn_aggregate(prep["a_hat"], z2, s2, None,
                           apply_relu=False, out_dtype=jnp.float32,
                           tm=tile, tk=tile)

    # linmaps0: identity (sum over singleton reference domains)
    return out_p[:prep["n"], :prep["c"]]


def build_adjacency(edge_index, num_nodes, reduction_type):
    src, dst = edge_index
    adj = jnp.zeros((num_nodes, num_nodes), jnp.float32)
    adj = adj.at[dst, src].set(1.0)
    adj = adj.at[jnp.arange(num_nodes), jnp.arange(num_nodes)].set(1.0)  # self loops
    if reduction_type == "mean":
        adj = adj / jnp.sum(adj, axis=1, keepdims=True)
    return adj


def _reference_forward(x, a_hat, params, dropout_mask):
    """Pure-jnp reference with the same bf16 operand/intermediate rounding."""
    bf = lambda v: v.astype(jnp.bfloat16).astype(jnp.float32)
    xb, ab = bf(x), bf(a_hat)
    w1s, w1a = bf(params["w1_self"]), bf(params["w1_agg"])
    w2s, w2a = bf(params["w2_self"]), bf(params["w2_agg"])
    s1 = xb @ w1s + params["b1"]
    z1 = bf(xb @ w1a)
    h1 = bf(jnp.maximum(ab @ z1 + s1, 0.0) * dropout_mask)   # bf16 h1, like kernel
    s2 = h1 @ w2s + params["b2"]
    z2 = bf(h1 @ w2a)
    return ab @ z2 + s2


if __name__ == "__main__":
    # Small synthetic shapes standing in for Cora (exercise padding + a 3x3
    # aggregation grid). For real Cora scale, use tile=512 (the default).
    N, F, H, C = 600, 100, 32, 7         # nodes, features, hidden, classes
    E = 1500                             # directed edges
    TILE = 256
    reduction_type = "mean"

    key = jax.random.PRNGKey(0)
    kx, ks, kd_, kw1a, kw1b, kw2a, kw2b, kdrop = jax.random.split(key, 8)

    x = jax.random.normal(kx, (N, F), jnp.float32)
    edge_index = jnp.stack([
        jax.random.randint(ks, (E,), 0, N),
        jax.random.randint(kd_, (E,), 0, N),
    ])
    a_hat = build_adjacency(edge_index, N, reduction_type)

    # ConvolutionalLayer_1P owns a Linear(2*in, out); split into self/agg halves.
    sc1 = 1.0 / jnp.sqrt(2.0 * F)
    sc2 = 1.0 / jnp.sqrt(2.0 * H)
    params = {
        "w1_self": sc1 * jax.random.normal(kw1a, (F, H), jnp.float32),
        "w1_agg":  sc1 * jax.random.normal(kw1b, (F, H), jnp.float32),
        "b1":      jnp.zeros((H,), jnp.float32),
        "w2_self": sc2 * jax.random.normal(kw2a, (H, C), jnp.float32),
        "w2_agg":  sc2 * jax.random.normal(kw2b, (H, C), jnp.float32),
        "b2":      jnp.zeros((C,), jnp.float32),
    }

    # Training-mode dropout (p=0.5), deterministic mask, inverted scaling.
    drop_p = 0.5
    dropout_mask = (jax.random.bernoulli(kdrop, 1.0 - drop_p, (N, H))
                    .astype(jnp.float32)) / (1.0 - drop_p)

    # One-time padding / casting, amortized across forward calls.
    prep = pgcn_prepare(x, a_hat, params, dropout_mask, tile=TILE)

    out = pgcn_forward(prep)
    jax.block_until_ready(out)

    assert out.shape == (N, C) and out.dtype == jnp.float32
    assert bool(jnp.all(jnp.isfinite(out)))
    ref = _reference_forward(x, a_hat, params, dropout_mask)
    max_err = float(jnp.max(jnp.abs(out - ref)))
    # bf16 rounding of the mean-normalized A_hat / Z / h1 dominates the error.
    assert max_err < 1e-1, f"max abs diff vs reference too large: {max_err}"
    print("KERNEL_OK")
</pallas_src>

<mosaic_0001>
module attributes {stable_mosaic.version = 11 : i64} {
  func.func @_xform_kernel(%arg0: i32, %arg1: memref<256x128xbf16, #tpu.memory_space<vmem>>, %arg2: memref<128x256xbf16, #tpu.memory_space<vmem>>, %arg3: memref<1x128xf32, #tpu.memory_space<vmem>>, %arg4: memref<256x128xf32, #tpu.memory_space<vmem>>, %arg5: memref<256x128xbf16, #tpu.memory_space<vmem>>) attributes {dimension_semantics = [#tpu.dimension_semantics<parallel>], iteration_bounds = array<i64: 3>, scalar_prefetch = 0 : i64, scratch_operands = 0 : i64, tpu.core_type = #tpu.core_type<tc>, window_params = [{transform_indices = @transform_0, window_bounds = array<i64: 256, 128>}, {pipeline_mode = #tpu.pipeline_mode<synchronous>, transform_indices = @transform_1, window_bounds = array<i64: 128, 256>}, {pipeline_mode = #tpu.pipeline_mode<synchronous>, transform_indices = @transform_2, window_bounds = array<i64: 1, 128>}, {transform_indices = @transform_3, window_bounds = array<i64: 256, 128>}, {transform_indices = @transform_4, window_bounds = array<i64: 256, 128>}]} {
    %c0 = arith.constant 0 : index
    %c0_0 = arith.constant 0 : index
    %0 = vector.load %arg1[%c0, %c0_0] : memref<256x128xbf16, #tpu.memory_space<vmem>>, vector<256x128xbf16>
    %c0_1 = arith.constant 0 : index
    %c0_2 = arith.constant 0 : index
    %1 = vector.load %arg2[%c0_1, %c0_2] : memref<128x256xbf16, #tpu.memory_space<vmem>>, vector<128x256xbf16>
    %cst = arith.constant dense<0.000000e+00> : vector<256x256xf32>
    %2 = tpu.matmul %0, %1, %cst {dimension_numbers = #tpu.dot_dimension_numbers<[1], [0], [0], [1], [0, 0, 1, 1], [], []>} : vector<256x128xbf16>, vector<128x256xbf16>, vector<256x256xf32> -> vector<256x256xf32>
    %3 = vector.extract_strided_slice %2 {offsets = [0, 0], sizes = [256, 128], strides = [1, 1]} : vector<256x256xf32> to vector<256x128xf32>
    %c0_3 = arith.constant 0 : index
    %c0_4 = arith.constant 0 : index
    %4 = vector.load %arg3[%c0_3, %c0_4] : memref<1x128xf32, #tpu.memory_space<vmem>>, vector<1x128xf32>
    %5 = vector.broadcast %4 : vector<1x128xf32> to vector<256x128xf32>
    %6 = arith.addf %3, %5 : vector<256x128xf32>
    %c0_5 = arith.constant 0 : index
    %c0_6 = arith.constant 0 : index
    %7 = vector.load %arg4[%c0_5, %c0_6] : memref<256x128xf32, #tpu.memory_space<vmem>>, vector<256x128xf32>
    tpu.vector_store %arg4[%c0_5, %c0_6], %6 {strides = array<i32>} : memref<256x128xf32, #tpu.memory_space<vmem>>, vector<256x128xf32>,
    %8 = vector.extract_strided_slice %2 {offsets = [0, 128], sizes = [256, 128], strides = [1, 1]} : vector<256x256xf32> to vector<256x128xf32>
    %9 = arith.truncf %8 : vector<256x128xf32> to vector<256x128xbf16>
    %c0_7 = arith.constant 0 : index
    %c0_8 = arith.constant 0 : index
    %10 = vector.load %arg5[%c0_7, %c0_8] : memref<256x128xbf16, #tpu.memory_space<vmem>>, vector<256x128xbf16>
    tpu.vector_store %arg5[%c0_7, %c0_8], %9 {strides = array<i32>} : memref<256x128xbf16, #tpu.memory_space<vmem>>, vector<256x128xbf16>,
    return
  }
  func.func @transform_0(%arg0: i32) -> (i32, i32) {
    %c0_i32 = arith.constant 0 : i32
    %c0_i32_0 = arith.constant 0 : i32
    return %arg0, %c0_i32 : i32, i32
  }
  func.func @transform_1(%arg0: i32) -> (i32, i32) {
    %c0_i32 = arith.constant 0 : i32
    %c0_i32_0 = arith.constant 0 : i32
    %c0_i32_1 = arith.constant 0 : i32
    return %c0_i32, %c0_i32_0 : i32, i32
  }
  func.func @transform_2(%arg0: i32) -> (i32, i32) {
    %c0_i32 = arith.constant 0 : i32
    %c0_i32_0 = arith.constant 0 : i32
    %c0_i32_1 = arith.constant 0 : i32
    return %c0_i32, %c0_i32_0 : i32, i32
  }
  func.func @transform_3(%arg0: i32) -> (i32, i32) {
    %c0_i32 = arith.constant 0 : i32
    %c0_i32_0 = arith.constant 0 : i32
    return %arg0, %c0_i32 : i32, i32
  }
  func.func @transform_4(%arg0: i32) -> (i32, i32) {
    %c0_i32 = arith.constant 0 : i32
    %c0_i32_0 = arith.constant 0 : i32
    return %arg0, %c0_i32 : i32, i32
  }
}

</mosaic_0001>

<llo_original>
// kernel: tpu_custom_call.1
$region0: #{tpu_custom_call.1}
  #allocation0 [shape = 'u32[]', space=smem, size = 0x4, offset = 0x4, fixed_abs, tag = 'smem constant byte address 0x4 - core index']
  #allocation1 [shape = 'u32[144,128]{1,0:T(1,128)}', space=vmem, size = 0x12000, scoped, tag = 'internal scratch']
  %s0 = inlined_call_operand.hbm [shape: bf16[768,128], index: 0, kind: input, shape index: {}]
  %s1 = inlined_call_operand.hbm [shape: bf16[128,256], index: 1, kind: input, shape index: {}]
  %s2 = inlined_call_operand.vmem [shape: f32[1,128], index: 2, kind: input, shape index: {}]
  %s3 = inlined_call_operand.hbm [shape: f32[768,128], index: 3, kind: output, shape index: {0}]
  %s4 = inlined_call_operand.hbm [shape: bf16[768,128], index: 4, kind: output, shape index: {1}]
  %5 = xla_tuple %s3, %s4
  %s6 = sld [smem:[#allocation0]]
  $region61: #{tpu_custom_call.1} parent=0
    _
  %s8 = ssub.s32 1, %s6
  %s9 = scalar_select 0, %s8, %s6
  $region1: #{tpu_custom_call.1} parent=0
    #allocation2 [shape = 'u8[131072]{0}', space=vmem, size = 0x20000, scoped, tag = 'input window, operand 0']
    #allocation3 [shape = 's32[2]{0}', space=sflag, size = 0x8, scoped, tag = 'scoped memory for tpu_custom_call.1']
    #allocation4 [shape = 's32[2]{0}', space=sflag, size = 0x8, scoped, tag = 'scoped memory for tpu_custom_call.1']
    #allocation5 [shape = 'u8[65536]{0}', space=vmem, size = 0x10000, scoped, tag = 'input window, operand 1, single buffered']
    #allocation6 [shape = 's32[1]{0}', space=sflag, size = 0x4, scoped, tag = 'scoped memory for tpu_custom_call.1']
    #allocation7 [shape = 'u8[262144]{0}', space=vmem, size = 0x40000, scoped, tag = 'output window, operand 0']
    #allocation8 [shape = 'u8[131072]{0}', space=vmem, size = 0x20000, scoped, tag = 'output window, operand 1']
    #allocation9 [shape = 's32[2]{0}', space=sflag, size = 0x8, scoped, tag = 'scoped memory for tpu_custom_call.1']
    %10 = vsyncpa [#allocation3], 0
    %s11 = scalar_lea.sflag [#allocation3], 1
    %12 = vsyncpa %s11, 0
    %13 = vsyncpa [#allocation6], 0
    %14 = vsyncpa [#allocation4], 0
    %s15 = scalar_lea.sflag [#allocation4], 1
    %16 = vsyncpa %s15, 0
    %17 = vsyncpa [#allocation9], 0
    %s18 = scalar_lea.sflag [#allocation9], 1
    %19 = vsyncpa %s18, 0
    loop: start=0, step=1, limit=5
    $region2: #{tpu_custom_call.1} parent=1 // loop_pre_header
      _
    $region3: #{tpu_custom_call.1} parent=1 // loop_header
      %s21 = sphi 0, %s25
      %p22 = scmp.ge.s32.totalorder %s21, 5
      %s31 = sphi 0, %s33
      %s34 = sphi 0, %s31
      %s35 = sphi 0, %s34
      %s51 = sphi 0, %s35
      %s55 = sphi 0, %s55
      %s57 = sphi 0, %s55
      %s58 = sphi 0, %s57
      %s72 = sphi 0, %s58
      %s76 = sphi 0, %s76
      %s78 = sphi 0, %s76
      %s79 = sphi 0, %s78
      %s93 = sphi 0, %s79
      %s99 = sphi 0, %s101
      %s102 = sphi 0, %s99
      %s103 = sphi 0, %s102
      %s119 = sphi 0, %s103
      %s125 = sphi 0, %s127
      %s128 = sphi 0, %s125
      %s129 = sphi 0, %s128
      %s145 = sphi 0, %s129
    $region4: #{tpu_custom_call.1} parent=1 // loop_header_branch
      %24 = sbr.rel (%p22) target = $region8
    $region5: #{tpu_custom_call.1} parent=1 // loop_body
      %s26 = ssub.s32 %s21, 1
      %s27 = ssub.s32 %s21, 2
      %s28 = sadd.s32 %s21, 1
      %s29 = ssub.s32 %s21, %s28
      %p30 = scmp.eq.s32.totalorder %s29, 0
      %s32 = sadd.s32 %s31, 1
      %s33 = scalar_select %p30, %s31, %s32
      %p36 = pneg %p30
      %p37 = scmp.eq.s32.totalorder %s21, 2
      %p38 = por %p36, %p37
      %p39 = scmp.ne.s32.totalorder %s31, %s34
      %p40 = scmp.eq.s32.totalorder %s21, 0
      %p41 = por %p39, %p40
      %p42 = scmp.ne.s32.totalorder %s31, %s34
      %p43 = scmp.eq.s32.totalorder %s26, 2
      %p44 = por %p42, %p43
      %p45 = scmp.ne.s32.totalorder %s34, %s35
      %p46 = scmp.eq.s32.totalorder %s26, 0
      %p47 = por %p45, %p46
      %p48 = scmp.ne.s32.totalorder %s34, %s35
      %p49 = scmp.eq.s32.totalorder %s27, 2
      %p50 = por %p48, %p49
      %p52 = scmp.ne.s32.totalorder %s35, %s51
      %p53 = scmp.eq.s32.totalorder %s27, 0
      %p54 = por %p52, %p53
      %s56 = sadd.s32 %s55, 1
      %p59 = scmp.eq.s32.totalorder %s21, 2
      %p60 = scmp.ne.s32.totalorder %s55, %s57
      %p61 = scmp.eq.s32.totalorder %s21, 0
      %p62 = por %p60, %p61
      %p63 = scmp.ne.s32.totalorder %s55, %s57
      %p64 = scmp.eq.s32.totalorder %s26, 2
      %p65 = por %p63, %p64
      %p66 = scmp.ne.s32.totalorder %s57, %s58
      %p67 = scmp.eq.s32.totalorder %s26, 0
      %p68 = por %p66, %p67
      %p69 = scmp.ne.s32.totalorder %s57, %s58
      %p70 = scmp.eq.s32.totalorder %s27, 2
      %p71 = por %p69, %p70
      %p73 = scmp.ne.s32.totalorder %s58, %s72
      %p74 = scmp.eq.s32.totalorder %s27, 0
      %p75 = por %p73, %p74
      %s77 = sadd.s32 %s76, 1
      %p80 = scmp.eq.s32.totalorder %s21, 2
      %p81 = scmp.ne.s32.totalorder %s76, %s78
      %p82 = scmp.eq.s32.totalorder %s21, 0
      %p83 = por %p81, %p82
      %p84 = scmp.ne.s32.totalorder %s76, %s78
      %p85 = scmp.eq.s32.totalorder %s26, 2
      %p86 = por %p84, %p85
      %p87 = scmp.ne.s32.totalorder %s78, %s79
      %p88 = scmp.eq.s32.totalorder %s26, 0
      %p89 = por %p87, %p88
      %p90 = scmp.ne.s32.totalorder %s78, %s79
      %p91 = scmp.eq.s32.totalorder %s27, 2
      %p92 = por %p90, %p91
      %p94 = scmp.ne.s32.totalorder %s79, %s93
      %p95 = scmp.eq.s32.totalorder %s27, 0
      %p96 = por %p94, %p95
      %s97 = ssub.s32 %s21, %s28
      %p98 = scmp.eq.s32.totalorder %s97, 0
      %s100 = sadd.s32 %s99, 1
      %s101 = scalar_select %p98, %s99, %s100
      %p104 = pneg %p98
      %p105 = scmp.eq.s32.totalorder %s21, 2
      %p106 = por %p104, %p105
      %p107 = scmp.ne.s32.totalorder %s99, %s102
      %p108 = scmp.eq.s32.totalorder %s21, 0
      %p109 = por %p107, %p108
      %p110 = scmp.ne.s32.totalorder %s99, %s102
      %p111 = scmp.eq.s32.totalorder %s26, 2
      %p112 = por %p110, %p111
      %p113 = scmp.ne.s32.totalorder %s102, %s103
      %p114 = scmp.eq.s32.totalorder %s26, 0
      %p115 = por %p113, %p114
      %p116 = scmp.ne.s32.totalorder %s102, %s103
      %p117 = scmp.eq.s32.totalorder %s27, 2
      %p118 = por %p116, %p117
      %p120 = scmp.ne.s32.totalorder %s103, %s119
      %p121 = scmp.eq.s32.totalorder %s27, 0
      %p122 = por %p120, %p121
      %s123 = ssub.s32 %s21, %s28
      %p124 = scmp.eq.s32.totalorder %s123, 0
      %s126 = sadd.s32 %s125, 1
      %s127 = scalar_select %p124, %s125, %s126
      %p130 = pneg %p124
      %p131 = scmp.eq.s32.totalorder %s21, 2
      %p132 = por %p130, %p131
      %p133 = scmp.ne.s32.totalorder %s125, %s128
      %p134 = scmp.eq.s32.totalorder %s21, 0
      %p135 = por %p133, %p134
      %p136 = scmp.ne.s32.totalorder %s125, %s128
      %p137 = scmp.eq.s32.totalorder %s26, 2
      %p138 = por %p136, %p137
      %p139 = scmp.ne.s32.totalorder %s128, %s129
      %p140 = scmp.eq.s32.totalorder %s26, 0
      %p141 = por %p139, %p140
      %p142 = scmp.ne.s32.totalorder %s128, %s129
      %p143 = scmp.eq.s32.totalorder %s27, 2
      %p144 = por %p142, %p143
      %p146 = scmp.ne.s32.totalorder %s129, %s145
      %p147 = scmp.eq.s32.totalorder %s27, 0
      %p148 = por %p146, %p147
      %p149 = scmp.le.s32.totalorder 1, %s21
      %p150 = scmp.lt.s32.totalorder %s21, 4
      %p151 = pnand %p149, %p150
      %p152 = pneg %p151
      // Predicated region
      $region9: #{tpu_custom_call.1} parent=5 // pred_check
        _
      $region10: #{tpu_custom_call.1} parent=5 // pred_check_branch
        %154 = sbr.rel (%p151) target = $region12
      $region11: #{tpu_custom_call.1} parent=5 // pred_region
        %s155 = ssub.s32 %s21, 1
        // Predicated region
        $region13: #{tpu_custom_call.1} parent=11 // pred_check
          %p156 = pneg %p68
        $region14: #{tpu_custom_call.1} parent=11 // pred_check_branch
          %158 = sbr.rel (%p156) target = $region16
        $region15: #{tpu_custom_call.1} parent=11 // pred_region
          %s160 = ssub.s32 2048, 2048
          %161 = vsyncadd [#allocation6], %s160
          %s162 = sshll.u32 [#allocation5], 4
          %s163 = int_to_ptr.vmem [resolvable:$true] %s162
          %168 = dma.hbm_to_vmem [thread:$0]  %s1, 2048, %s163, [#allocation6], 128, 128, 8
        $region16: #{tpu_custom_call.1} parent=11 // pred_fallthru
          _
        // Predicated region
        $region17: #{tpu_custom_call.1} parent=11 // pred_check
          %p169 = pneg %p89
        $region18: #{tpu_custom_call.1} parent=11 // pred_check_branch
          %171 = sbr.rel (%p169) target = $region20
        $region19: #{tpu_custom_call.1} parent=11 // pred_region
          _
        $region20: #{tpu_custom_call.1} parent=11 // pred_fallthru
          _
      $region12: #{tpu_custom_call.1} parent=5 // pred_fallthru
        _
      %p172 = scmp.lt.s32.totalorder %s21, 3
      // Predicated region
      $region21: #{tpu_custom_call.1} parent=5 // pred_check
        %p173 = pneg %p172
      $region22: #{tpu_custom_call.1} parent=5 // pred_check_branch
        %175 = sbr.rel (%p173) target = $region24
      $region23: #{tpu_custom_call.1} parent=5 // pred_region
        // Predicated region
        $region25: #{tpu_custom_call.1} parent=23 // pred_check
          %p176 = pneg %p41
        $region26: #{tpu_custom_call.1} parent=23 // pred_check_branch
          %178 = sbr.rel (%p176) target = $region28
        $region27: #{tpu_custom_call.1} parent=23 // pred_region
          %s179 = sand.u32 %s31, 1
          %s180 = scalar_lea.sflag [#allocation3], %s179
          %s181 = sand.u32 %s31, 1
          %s182 = smul.addr %s181, 128
          %s183 = scalar_lea.vmem [#allocation2], %s182
          %s184 = smul.u32 32, %s21
          %s186 = ssub.s32 2048, 2048
          %187 = vsyncadd %s180, %s186
          %s188 = smul.addr %s184, 64
          %s189 = scalar_lea.hbm %s0, %s188
          %s190 = sshll.u32 %s183, 4
          %s191 = int_to_ptr.vmem [resolvable:$true] %s190
          %196 = dma.hbm_to_vmem [thread:$0]  %s189, 2048, %s191, %s180, 64, 64, 4
        $region28: #{tpu_custom_call.1} parent=23 // pred_fallthru
          _
      $region24: #{tpu_custom_call.1} parent=5 // pred_fallthru
        _
      %p197 = scmp.le.s32.totalorder 1, %s21
      %p198 = scmp.lt.s32.totalorder %s21, 4
      %p199 = pnand %p197, %p198
      %p200 = pneg %p199
      // Predicated region
      $region29: #{tpu_custom_call.1} parent=5 // pred_check
        _
      $region30: #{tpu_custom_call.1} parent=5 // pred_check_branch
        %202 = sbr.rel (%p199) target = $region32
      $region31: #{tpu_custom_call.1} parent=5 // pred_region
        %s203 = ssub.s32 %s21, 1
        %s204 = sand.u32 %s34, 1
        %s205 = scalar_lea.sflag [#allocation3], %s204
        %s206 = sand.u32 %s34, 1
        %s207 = smul.addr %s206, 128
        %s208 = scalar_lea.vmem [#allocation2], %s207
        // Predicated region
        $region33: #{tpu_custom_call.1} parent=31 // pred_check
          %p209 = pneg %p47
        $region34: #{tpu_custom_call.1} parent=31 // pred_check_branch
          %211 = sbr.rel (%p209) target = $region36
        $region35: #{tpu_custom_call.1} parent=31 // pred_region
          %212 = dma.done %s205, 2048
        $region36: #{tpu_custom_call.1} parent=31 // pred_fallthru
          _
        // Predicated region
        $region37: #{tpu_custom_call.1} parent=31 // pred_check
          %p213 = pneg %p68
        $region38: #{tpu_custom_call.1} parent=31 // pred_check_branch
          %215 = sbr.rel (%p213) target = $region40
        $region39: #{tpu_custom_call.1} parent=31 // pred_region
          %216 = dma.done [#allocation6], 2048
        $region40: #{tpu_custom_call.1} parent=31 // pred_fallthru
          _
        %s217 = sand.u32 %s34, 1
        %s218 = scalar_lea.sflag [#allocation3], %s217
        %s219 = sand.u32 %s34, 1
        %s220 = smul.addr %s219, 128
        %s221 = scalar_lea.vmem [#allocation2], %s220
        %p222 = pneg %p47
        %p223 = pneg %p44
        %p224 = pneg %p68
        %p225 = pneg %p65
        %p226 = pneg %p89
        %p227 = pneg %p86
        %p228 = pneg %p115
        %p229 = pneg %p112
        %s230 = sand.u32 %s102, 1
        %s231 = scalar_lea.sflag [#allocation4], %s230
        %s232 = sand.u32 %s102, 1
        %s233 = smul.addr %s232, 256
        %s234 = scalar_lea.vmem [#allocation7], %s233
        %p235 = pneg %p141
        %p236 = pneg %p138
        %s237 = sand.u32 %s128, 1
        %s238 = scalar_lea.sflag [#allocation9], %s237
        %s239 = sand.u32 %s128, 1
        %s240 = smul.addr %s239, 128
        %s241 = scalar_lea.vmem [#allocation8], %s240
        %s242 = smul.u32 32, %s26
        %s243 = smul.u32 32, %s26
        %s244 = smul.u32 32, %s26
        %v246 = vld [vmem:[%s208] sm:$0xf]
        %v247 = vld [vmem:[%s208 + $0x4] sm:$0xf]
        %v248 = vld [vmem:[%s208 + $0x8] sm:$0xf]
        %v249 = vld [vmem:[%s208 + $0xc] sm:$0xf]
        %v250 = vld [vmem:[%s208 + $0x10] sm:$0xf]
        %v251 = vld [vmem:[%s208 + $0x14] sm:$0xf]
        %v252 = vld [vmem:[%s208 + $0x18] sm:$0xf]
        %v253 = vld [vmem:[%s208 + $0x1c] sm:$0xf]
        %v254 = vld [vmem:[%s208 + $0x20] sm:$0xf]
        %v255 = vld [vmem:[%s208 + $0x24] sm:$0xf]
        %v256 = vld [vmem:[%s208 + $0x28] sm:$0xf]
        %v257 = vld [vmem:[%s208 + $0x2c] sm:$0xf]
        %v258 = vld [vmem:[%s208 + $0x30] sm:$0xf]
        %v259 = vld [vmem:[%s208 + $0x34] sm:$0xf]
        %v260 = vld [vmem:[%s208 + $0x38] sm:$0xf]
        %v261 = vld [vmem:[%s208 + $0x3c] sm:$0xf]
        %v262 = vld [vmem:[%s208 + $0x40] sm:$0xf]
        %v263 = vld [vmem:[%s208 + $0x44] sm:$0xf]
        %v264 = vld [vmem:[%s208 + $0x48] sm:$0xf]
        %v265 = vld [vmem:[%s208 + $0x4c] sm:$0xf]
        %v266 = vld [vmem:[%s208 + $0x50] sm:$0xf]
        %v267 = vld [vmem:[%s208 + $0x54] sm:$0xf]
        %v268 = vld [vmem:[%s208 + $0x58] sm:$0xf]
        %v269 = vld [vmem:[%s208 + $0x5c] sm:$0xf]
        %v270 = vld [vmem:[%s208 + $0x60] sm:$0xf]
        %v271 = vld [vmem:[%s208 + $0x64] sm:$0xf]
        %v272 = vld [vmem:[%s208 + $0x68] sm:$0xf]
        %v273 = vld [vmem:[%s208 + $0x6c] sm:$0xf]
        %v274 = vld [vmem:[%s208 + $0x70] sm:$0xf]
        %v275 = vld [vmem:[%s208 + $0x74] sm:$0xf]
        %v276 = vld [vmem:[%s208 + $0x78] sm:$0xf]
        %v277 = vld [vmem:[%s208 + $0x7c] sm:$0xf]
        %v278 = vld [vmem:[#allocation5] sm:$0xff]
        %v279 = vld [vmem:[#allocation5 + $0x8] sm:$0xff]
        %v280 = vld [vmem:[#allocation5 + $0x10] sm:$0xff]
        %v281 = vld [vmem:[#allocation5 + $0x18] sm:$0xff]
        %v282 = vld [vmem:[#allocation5 + $0x20] sm:$0xff]
        %v283 = vld [vmem:[#allocation5 + $0x28] sm:$0xff]
        %v284 = vld [vmem:[#allocation5 + $0x30] sm:$0xff]
        %v285 = vld [vmem:[#allocation5 + $0x38] sm:$0xff]
        %v286 = vld [vmem:[#allocation5 + $0x40] sm:$0xff]
        %v287 = vld [vmem:[#allocation5 + $0x48] sm:$0xff]
        %v288 = vld [vmem:[#allocation5 + $0x50] sm:$0xff]
        %v289 = vld [vmem:[#allocation5 + $0x58] sm:$0xff]
        %v290 = vld [vmem:[#allocation5 + $0x60] sm:$0xff]
        %v291 = vld [vmem:[#allocation5 + $0x68] sm:$0xff]
        %v292 = vld [vmem:[#allocation5 + $0x70] sm:$0xff]
        %v293 = vld [vmem:[#allocation5 + $0x78] sm:$0xff]
        %v326 = vunpack.c.l.b16 %v246
        %v327 = vunpack.c.l.b16 %v247
        %v328 = vunpack.c.l.b16 %v248
        %v329 = vunpack.c.l.b16 %v249
        %v330 = vunpack.c.l.b16 %v250
        %v331 = vunpack.c.l.b16 %v251
        %v332 = vunpack.c.l.b16 %v252
        %v333 = vunpack.c.l.b16 %v253
        %v334 = vunpack.c.l.b16 %v254
        %v335 = vunpack.c.l.b16 %v255
        %v336 = vunpack.c.l.b16 %v256
        %v337 = vunpack.c.l.b16 %v257
        %v338 = vunpack.c.l.b16 %v258
        %v339 = vunpack.c.l.b16 %v259
        %v340 = vunpack.c.l.b16 %v260
        %v341 = vunpack.c.l.b16 %v261
        %v342 = vunpack.c.l.b16 %v262
        %v343 = vunpack.c.l.b16 %v263
        %v344 = vunpack.c.l.b16 %v264
        %v345 = vunpack.c.l.b16 %v265
        %v346 = vunpack.c.l.b16 %v266
        %v347 = vunpack.c.l.b16 %v267
        %v348 = vunpack.c.l.b16 %v268
        %v349 = vunpack.c.l.b16 %v269
        %v350 = vunpack.c.l.b16 %v270
        %v351 = vunpack.c.l.b16 %v271
        %v352 = vunpack.c.l.b16 %v272
        %v353 = vunpack.c.l.b16 %v273
        %v354 = vunpack.c.l.b16 %v274
        %v355 = vunpack.c.l.b16 %v275
        %v356 = vunpack.c.l.b16 %v276
        %v357 = vunpack.c.l.b16 %v277
        %v358 = vpack.c.b16 %v327, %v326
        %v359 = vpack.c.b16 %v329, %v328
        %v360 = vpack.c.b16 %v331, %v330
        %v361 = vpack.c.b16 %v333, %v332
        %v362 = vpack.c.b16 %v335, %v334
        %v363 = vpack.c.b16 %v337, %v336
        %v364 = vpack.c.b16 %v339, %v338
        %v365 = vpack.c.b16 %v341, %v340
        %v366 = vpack.c.b16 %v343, %v342
        %v367 = vpack.c.b16 %v345, %v344
        %v368 = vpack.c.b16 %v347, %v346
        %v369 = vpack.c.b16 %v349, %v348
        %v370 = vpack.c.b16 %v351, %v350
        %v371 = vpack.c.b16 %v353, %v352
        %v372 = vpack.c.b16 %v355, %v354
        %v373 = vpack.c.b16 %v357, %v356
        %v406 = vunpack.c.l.b16 %v278
        %v407 = vunpack.c.h.b16 %v278
        %v408 = vunpack.c.l.b16 %v279
        %v409 = vunpack.c.h.b16 %v279
        %v410 = vunpack.c.l.b16 %v280
        %v411 = vunpack.c.h.b16 %v280
        %v412 = vunpack.c.l.b16 %v281
        %v413 = vunpack.c.h.b16 %v281
        %v414 = vunpack.c.l.b16 %v282
        %v415 = vunpack.c.h.b16 %v282
        %v416 = vunpack.c.l.b16 %v283
        %v417 = vunpack.c.h.b16 %v283
        %v418 = vunpack.c.l.b16 %v284
        %v419 = vunpack.c.h.b16 %v284
        %v420 = vunpack.c.l.b16 %v285
        %v421 = vunpack.c.h.b16 %v285
        %v422 = vunpack.c.l.b16 %v286
        %v423 = vunpack.c.h.b16 %v286
        %v424 = vunpack.c.l.b16 %v287
        %v425 = vunpack.c.h.b16 %v287
        %v426 = vunpack.c.l.b16 %v288
        %v427 = vunpack.c.h.b16 %v288
        %v428 = vunpack.c.l.b16 %v289
        %v429 = vunpack.c.h.b16 %v289
        %v430 = vunpack.c.l.b16 %v290
        %v431 = vunpack.c.h.b16 %v290
        %v432 = vunpack.c.l.b16 %v291
        %v433 = vunpack.c.h.b16 %v291
        %v434 = vunpack.c.l.b16 %v292
        %v435 = vunpack.c.h.b16 %v292
        %v436 = vunpack.c.l.b16 %v293
        %v437 = vunpack.c.h.b16 %v293
        %v438 = vpack.c.b16 %v408, %v406
        %v439 = vpack.c.b16 %v409, %v407
        %v440 = vpack.c.b16 %v412, %v410
        %v441 = vpack.c.b16 %v413, %v411
        %v442 = vpack.c.b16 %v416, %v414
        %v443 = vpack.c.b16 %v417, %v415
        %v444 = vpack.c.b16 %v420, %v418
        %v445 = vpack.c.b16 %v421, %v419
        %v446 = vpack.c.b16 %v424, %v422
        %v447 = vpack.c.b16 %v425, %v423
        %v448 = vpack.c.b16 %v428, %v426
        %v449 = vpack.c.b16 %v429, %v427
        %v450 = vpack.c.b16 %v432, %v430
        %v451 = vpack.c.b16 %v433, %v431
        %v452 = vpack.c.b16 %v436, %v434
        %v453 = vpack.c.b16 %v437, %v435
        %470 = vmatprep.subr.bf16.mxu0 %v439
        %471 = vmatpush1.bf16.msra.mxu0 %v438
        %472 = vmatprep.subr.bf16.mxu0 %v441
        %473 = vmatpush1.bf16.msra.mxu0 %v440
        %474 = vmatprep.subr.bf16.mxu0 %v443
        %475 = vmatpush1.bf16.msra.mxu0 %v442
        %476 = vmatprep.subr.bf16.mxu0 %v445
        %477 = vmatpush1.bf16.msra.mxu0 %v444
        %478 = vmatprep.subr.bf16.mxu0 %v447
        %479 = vmatpush1.bf16.msra.mxu0 %v446
        %480 = vmatprep.subr.bf16.mxu0 %v449
        %481 = vmatpush1.bf16.msra.mxu0 %v448
        %482 = vmatprep.subr.bf16.mxu0 %v451
        %483 = vmatpush1.bf16.msra.mxu0 %v450
        %484 = vmatprep.subr.bf16.mxu0 %v453
        %485 = vmatpush1.bf16.msra.mxu0 %v452
        %486 = vmatprep.subr.bf16.mxu0 0
        %487 = vmatpush1.bf16.msra.mxu0 0
        %488 = vmatprep.subr.bf16.mxu0 0
        %489 = vmatpush1.bf16.msra.mxu0 0
        %490 = vmatprep.subr.bf16.mxu0 0
        %491 = vmatpush1.bf16.msra.mxu0 0
        %492 = vmatprep.subr.bf16.mxu0 0
        %493 = vmatpush1.bf16.msra.mxu0 0
        %494 = vmatprep.subr.bf16.mxu0 0
        %495 = vmatpush1.bf16.msra.mxu0 0
        %496 = vmatprep.subr.bf16.mxu0 0
        %497 = vmatpush1.bf16.msra.mxu0 0
        %498 = vmatprep.subr.bf16.mxu0 0
        %499 = vmatpush1.bf16.msra.mxu0 0
        %500 = vmatprep.subr.bf16.mxu0 0
        %501 = vmatpush1.bf16.msra.mxu0 0
        %502 = vmatprep.mubr.bf16.mxu0 0
        %503 = vmatmul.mubr.bf16.gmra.mrb[0].mxu0 %v358
        %v504 = vpop.f32.mrb[0].mxu0
        %v505 = vadd.f32 0.0, %v504
        %v506 = vpop.f32.mrb[0].mxu0
        %v507 = vadd.f32 0.0, %v506
        %v508 = vpop.f32.mrb[0].mxu0
        %v509 = vadd.f32 0.0, %v508
        %v510 = vpop.f32.mrb[0].mxu0
        %v511 = vadd.f32 0.0, %v510
        %512 = vmatprep.mubr.bf16.mxu0 0
        %513 = vmatmul.mubr.bf16.gmra.mrb[0].mxu0 %v359
        %v514 = vpop.f32.mrb[0].mxu0
        %v515 = vadd.f32 0.0, %v514
        %v516 = vpop.f32.mrb[0].mxu0
        %v517 = vadd.f32 0.0, %v516
        %v518 = vpop.f32.mrb[0].mxu0
        %v519 = vadd.f32 0.0, %v518
        %v520 = vpop.f32.mrb[0].mxu0
        %v521 = vadd.f32 0.0, %v520
        %522 = vmatprep.mubr.bf16.mxu0 0
        %523 = vmatmul.mubr.bf16.gmra.mrb[0].mxu0 %v360
        %v524 = vpop.f32.mrb[0].mxu0
        %v525 = vadd.f32 0.0, %v524
        %v526 = vpop.f32.mrb[0].mxu0
        %v527 = vadd.f32 0.0, %v526
        %v528 = vpop.f32.mrb[0].mxu0
        %v529 = vadd.f32 0.0, %v528
        %v530 = vpop.f32.mrb[0].mxu0
        %v531 = vadd.f32 0.0, %v530
        %532 = vmatprep.mubr.bf16.mxu0 0
        %533 = vmatmul.mubr.bf16.gmra.mrb[0].mxu0 %v361
        %v534 = vpop.f32.mrb[0].mxu0
        %v535 = vadd.f32 0.0, %v534
        %v536 = vpop.f32.mrb[0].mxu0
        %v537 = vadd.f32 0.0, %v536
        %v538 = vpop.f32.mrb[0].mxu0
        %v539 = vadd.f32 0.0, %v538
        %v540 = vpop.f32.mrb[0].mxu0
        %v541 = vadd.f32 0.0, %v540
        %542 = vmatprep.mubr.bf16.mxu0 0
        %543 = vmatmul.mubr.bf16.gmra.mrb[0].mxu0 %v362
        %v544 = vpop.f32.mrb[0].mxu0
        %v545 = vadd.f32 0.0, %v544
        %v546 = vpop.f32.mrb[0].mxu0
        %v547 = vadd.f32 0.0, %v546
        %v548 = vpop.f32.mrb[0].mxu0
        %v549 = vadd.f32 0.0, %v548
        %v550 = vpop.f32.mrb[0].mxu0
        %v551 = vadd.f32 0.0, %v550
        %552 = vmatprep.mubr.bf16.mxu0 0
        %553 = vmatmul.mubr.bf16.gmra.mrb[0].mxu0 %v363
        %v554 = vpop.f32.mrb[0].mxu0
        %v555 = vadd.f32 0.0, %v554
        %v556 = vpop.f32.mrb[0].mxu0
        %v557 = vadd.f32 0.0, %v556
        %v558 = vpop.f32.mrb[0].mxu0
        %v559 = vadd.f32 0.0, %v558
        %v560 = vpop.f32.mrb[0].mxu0
        %v561 = vadd.f32 0.0, %v560
        %562 = vmatprep.mubr.bf16.mxu0 0
        %563 = vmatmul.mubr.bf16.gmra.mrb[0].mxu0 %v364
        %v564 = vpop.f32.mrb[0].mxu0
        %v565 = vadd.f32 0.0, %v564
        %v566 = vpop.f32.mrb[0].mxu0
        %v567 = vadd.f32 0.0, %v566
        %v568 = vpop.f32.mrb[0].mxu0
        %v569 = vadd.f32 0.0, %v568
        %v570 = vpop.f32.mrb[0].mxu0
        %v571 = vadd.f32 0.0, %v570
        %572 = vmatprep.mubr.bf16.mxu0 0
        %573 = vmatmul.mubr.bf16.gmra.mrb[0].mxu0 %v365
        %v574 = vpop.f32.mrb[0].mxu0
        %v575 = vadd.f32 0.0, %v574
        %v576 = vpop.f32.mrb[0].mxu0
        %v577 = vadd.f32 0.0, %v576
        %v578 = vpop.f32.mrb[0].mxu0
        %v579 = vadd.f32 0.0, %v578
        %v580 = vpop.f32.mrb[0].mxu0
        %v581 = vadd.f32 0.0, %v580
        %582 = vmatprep.mubr.bf16.mxu0 0
        %583 = vmatmul.mubr.bf16.gmra.mrb[0].mxu0 %v366
        %v584 = vpop.f32.mrb[0].mxu0
        %v585 = vadd.f32 0.0, %v584
        %v586 = vpop.f32.mrb[0].mxu0
        %v587 = vadd.f32 0.0, %v586
        %v588 = vpop.f32.mrb[0].mxu0
        %v589 = vadd.f32 0.0, %v588
        %v590 = vpop.f32.mrb[0].mxu0
        %v591 = vadd.f32 0.0, %v590
        %592 = vmatprep.mubr.bf16.mxu0 0
        %593 = vmatmul.mubr.bf16.gmra.mrb[0].mxu0 %v367
        %v594 = vpop.f32.mrb[0].mxu0
        %v595 = vadd.f32 0.0, %v594
        %v596 = vpop.f32.mrb[0].mxu0
        %v597 = vadd.f32 0.0, %v596
        %v598 = vpop.f32.mrb[0].mxu0
        %v599 = vadd.f32 0.0, %v598
        %v600 = vpop.f32.mrb[0].mxu0
        %v601 = vadd.f32 0.0, %v600
        %602 = vmatprep.mubr.bf16.mxu0 0
        %603 = vmatmul.mubr.bf16.gmra.mrb[0].mxu0 %v368
        %v604 = vpop.f32.mrb[0].mxu0
        %v605 = vadd.f32 0.0, %v604
        %v606 = vpop.f32.mrb[0].mxu0
        %v607 = vadd.f32 0.0, %v606
        %v608 = vpop.f32.mrb[0].mxu0
        %v609 = vadd.f32 0.0, %v608
        %v610 = vpop.f32.mrb[0].mxu0
        %v611 = vadd.f32 0.0, %v610
        %612 = vmatprep.mubr.bf16.mxu0 0
        %613 = vmatmul.mubr.bf16.gmra.mrb[0].mxu0 %v369
        %v614 = vpop.f32.mrb[0].mxu0
        %v615 = vadd.f32 0.0, %v614
        %v616 = vpop.f32.mrb[0].mxu0
        %v617 = vadd.f32 0.0, %v616
        %v618 = vpop.f32.mrb[0].mxu0
        %v619 = vadd.f32 0.0, %v618
        %v620 = vpop.f32.mrb[0].mxu0
        %v621 = vadd.f32 0.0, %v620
        %622 = vmatprep.mubr.bf16.mxu0 0
        %623 = vmatmul.mubr.bf16.gmra.mrb[0].mxu0 %v370
        %v624 = vpop.f32.mrb[0].mxu0
        %v625 = vadd.f32 0.0, %v624
        %v626 = vpop.f32.mrb[0].mxu0
        %v627 = vadd.f32 0.0, %v626
        %v628 = vpop.f32.mrb[0].mxu0
        %v629 = vadd.f32 0.0, %v628
        %v630 = vpop.f32.mrb[0].mxu0
        %v631 = vadd.f32 0.0, %v630
        %632 = vmatprep.mubr.bf16.mxu0 0
        %633 = vmatmul.mubr.bf16.gmra.mrb[0].mxu0 %v371
        %v634 = vpop.f32.mrb[0].mxu0
        %v635 = vadd.f32 0.0, %v634
        %v636 = vpop.f32.mrb[0].mxu0
        %v637 = vadd.f32 0.0, %v636
        %v638 = vpop.f32.mrb[0].mxu0
        %v639 = vadd.f32 0.0, %v638
        %v640 = vpop.f32.mrb[0].mxu0
        %v641 = vadd.f32 0.0, %v640
        %642 = vmatprep.mubr.bf16.mxu0 0
        %643 = vmatmul.mubr.bf16.gmra.mrb[0].mxu0 %v372
        %v644 = vpop.f32.mrb[0].mxu0
        %v645 = vadd.f32 0.0, %v644
        %v646 = vpop.f32.mrb[0].mxu0
        %v647 = vadd.f32 0.0, %v646
        %v648 = vpop.f32.mrb[0].mxu0
        %v649 = vadd.f32 0.0, %v648
        %v650 = vpop.f32.mrb[0].mxu0
        %v651 = vadd.f32 0.0, %v650
        %652 = vmatprep.mubr.bf16.mxu0 0
        %653 = vmatmul.mubr.bf16.gmra.mrb[0].mxu0 %v373
        %v654 = vpop.f32.mrb[0].mxu0
        %v655 = vadd.f32 0.0, %v654
        %v656 = vpop.f32.mrb[0].mxu0
        %v657 = vadd.f32 0.0, %v656
        %v658 = vpop.f32.mrb[0].mxu0
        %v659 = vadd.f32 0.0, %v658
        %v660 = vpop.f32.mrb[0].mxu0
        %v661 = vadd.f32 0.0, %v660
        %662 = vdwg.mxu0
        %v663 = vld [vmem:[%s2] sm:$0x1]
        %v665 = vlaneseq
        %v666 = vshrl.u32 %v665, 7
        %v667 = vsub.s32 0, %v666
        %v668 = vrot.slane %v663, %v667
        %v670 = vadd.f32 %v505, %v668
        %v671 = vadd.f32 %v509, %v668
        %v672 = vadd.f32 %v515, %v668
        %v673 = vadd.f32 %v519, %v668
        %v674 = vadd.f32 %v525, %v668
        %v675 = vadd.f32 %v529, %v668
        %v676 = vadd.f32 %v535, %v668
        %v677 = vadd.f32 %v539, %v668
        %v678 = vadd.f32 %v545, %v668
        %v679 = vadd.f32 %v549, %v668
        %v680 = vadd.f32 %v555, %v668
        %v681 = vadd.f32 %v559, %v668
        %v682 = vadd.f32 %v565, %v668
        %v683 = vadd.f32 %v569, %v668
        %v684 = vadd.f32 %v575, %v668
        %v685 = vadd.f32 %v579, %v668
        %v686 = vadd.f32 %v585, %v668
        %v687 = vadd.f32 %v589, %v668
        %v688 = vadd.f32 %v595, %v668
        %v689 = vadd.f32 %v599, %v668
        %v690 = vadd.f32 %v605, %v668
        %v691 = vadd.f32 %v609, %v668
        %v692 = vadd.f32 %v615, %v668
        %v693 = vadd.f32 %v619, %v668
        %v694 = vadd.f32 %v625, %v668
        %v695 = vadd.f32 %v629, %v668
        %v696 = vadd.f32 %v635, %v668
        %v697 = vadd.f32 %v639, %v668
        %v698 = vadd.f32 %v645, %v668
        %v699 = vadd.f32 %v649, %v668
        %v700 = vadd.f32 %v655, %v668
        %v701 = vadd.f32 %v659, %v668
        %702 = vst [vmem:[%s234] sm:$0xff] %v670
        %703 = vst [vmem:[%s234 + $0x8] sm:$0xff] %v671
        %704 = vst [vmem:[%s234 + $0x10] sm:$0xff] %v672
        %705 = vst [vmem:[%s234 + $0x18] sm:$0xff] %v673
        %706 = vst [vmem:[%s234 + $0x20] sm:$0xff] %v674
        %707 = vst [vmem:[%s234 + $0x28] sm:$0xff] %v675
        %708 = vst [vmem:[%s234 + $0x30] sm:$0xff] %v676
        %709 = vst [vmem:[%s234 + $0x38] sm:$0xff] %v677
        %710 = vst [vmem:[%s234 + $0x40] sm:$0xff] %v678
        %711 = vst [vmem:[%s234 + $0x48] sm:$0xff] %v679
        %712 = vst [vmem:[%s234 + $0x50] sm:$0xff] %v680
        %713 = vst [vmem:[%s234 + $0x58] sm:$0xff] %v681
        %714 = vst [vmem:[%s234 + $0x60] sm:$0xff] %v682
        %715 = vst [vmem:[%s234 + $0x68] sm:$0xff] %v683
        %716 = vst [vmem:[%s234 + $0x70] sm:$0xff] %v684
        %717 = vst [vmem:[%s234 + $0x78] sm:$0xff] %v685
        %718 = vst [vmem:[%s234 + $0x80] sm:$0xff] %v686
        %719 = vst [vmem:[%s234 + $0x88] sm:$0xff] %v687
        %720 = vst [vmem:[%s234 + $0x90] sm:$0xff] %v688
        %721 = vst [vmem:[%s234 + $0x98] sm:$0xff] %v689
        %722 = vst [vmem:[%s234 + $0xa0] sm:$0xff] %v690
        %723 = vst [vmem:[%s234 + $0xa8] sm:$0xff] %v691
        %724 = vst [vmem:[%s234 + $0xb0] sm:$0xff] %v692
        %725 = vst [vmem:[%s234 + $0xb8] sm:$0xff] %v693
        %726 = vst [vmem:[%s234 + $0xc0] sm:$0xff] %v694
        %727 = vst [vmem:[%s234 + $0xc8] sm:$0xff] %v695
        %728 = vst [vmem:[%s234 + $0xd0] sm:$0xff] %v696
        %729 = vst [vmem:[%s234 + $0xd8] sm:$0xff] %v697
        %730 = vst [vmem:[%s234 + $0xe0] sm:$0xff] %v698
        %731 = vst [vmem:[%s234 + $0xe8] sm:$0xff] %v699
        %732 = vst [vmem:[%s234 + $0xf0] sm:$0xff] %v700
        %733 = vst [vmem:[%s234 + $0xf8] sm:$0xff] %v701
        %v734 = vpack.c.bf16 %v511, %v507
        %v735 = vpack.c.bf16 %v521, %v517
        %v736 = vpack.c.bf16 %v531, %v527
        %v737 = vpack.c.bf16 %v541, %v537
        %v738 = vpack.c.bf16 %v551, %v547
        %v739 = vpack.c.bf16 %v561, %v557
        %v740 = vpack.c.bf16 %v571, %v567
        %v741 = vpack.c.bf16 %v581, %v577
        %v742 = vpack.c.bf16 %v591, %v587
        %v743 = vpack.c.bf16 %v601, %v597
        %v744 = vpack.c.bf16 %v611, %v607
        %v745 = vpack.c.bf16 %v621, %v617
        %v746 = vpack.c.bf16 %v631, %v627
        %v747 = vpack.c.bf16 %v641, %v637
        %v748 = vpack.c.bf16 %v651, %v647
        %v749 = vpack.c.bf16 %v661, %v657
        %v766 = vunpack.c.l.b16 %v734
        %v767 = vunpack.c.h.b16 %v734
        %v768 = vunpack.c.l.b16 %v735
        %v769 = vunpack.c.h.b16 %v735
        %v770 = vunpack.c.l.b16 %v736
        %v771 = vunpack.c.h.b16 %v736
        %v772 = vunpack.c.l.b16 %v737
        %v773 = vunpack.c.h.b16 %v737
        %v774 = vunpack.c.l.b16 %v738
        %v775 = vunpack.c.h.b16 %v738
        %v776 = vunpack.c.l.b16 %v739
        %v777 = vunpack.c.h.b16 %v739
        %v778 = vunpack.c.l.b16 %v740
        %v779 = vunpack.c.h.b16 %v740
        %v780 = vunpack.c.l.b16 %v741
        %v781 = vunpack.c.h.b16 %v741
        %v782 = vunpack.c.l.b16 %v742
        %v783 = vunpack.c.h.b16 %v742
        %v784 = vunpack.c.l.b16 %v743
        %v785 = vunpack.c.h.b16 %v743
        %v786 = vunpack.c.l.b16 %v744
        %v787 = vunpack.c.h.b16 %v744
        %v788 = vunpack.c.l.b16 %v745
        %v789 = vunpack.c.h.b16 %v745
        %v790 = vunpack.c.l.b16 %v746
        %v791 = vunpack.c.h.b16 %v746
        %v792 = vunpack.c.l.b16 %v747
        %v793 = vunpack.c.h.b16 %v747
        %v794 = vunpack.c.l.b16 %v748
        %v795 = vunpack.c.h.b16 %v748
        %v796 = vunpack.c.l.b16 %v749
        %v797 = vunpack.c.h.b16 %v749
        %v798 = vpack.c.b16 %v766, %v766
        %v799 = vpack.c.b16 %v767, %v767
        %v800 = vpack.c.b16 %v768, %v768
        %v801 = vpack.c.b16 %v769, %v769
        %v802 = vpack.c.b16 %v770, %v770
        %v803 = vpack.c.b16 %v771, %v771
        %v804 = vpack.c.b16 %v772, %v772
        %v805 = vpack.c.b16 %v773, %v773
        %v806 = vpack.c.b16 %v774, %v774
        %v807 = vpack.c.b16 %v775, %v775
        %v808 = vpack.c.b16 %v776, %v776
        %v809 = vpack.c.b16 %v777, %v777
        %v810 = vpack.c.b16 %v778, %v778
        %v811 = vpack.c.b16 %v779, %v779
        %v812 = vpack.c.b16 %v780, %v780
        %v813 = vpack.c.b16 %v781, %v781
        %v814 = vpack.c.b16 %v782, %v782
        %v815 = vpack.c.b16 %v783, %v783
        %v816 = vpack.c.b16 %v784, %v784
        %v817 = vpack.c.b16 %v785, %v785
        %v818 = vpack.c.b16 %v786, %v786
        %v819 = vpack.c.b16 %v787, %v787
        %v820 = vpack.c.b16 %v788, %v788
        %v821 = vpack.c.b16 %v789, %v789
        %v822 = vpack.c.b16 %v790, %v790
        %v823 = vpack.c.b16 %v791, %v791
        %v824 = vpack.c.b16 %v792, %v792
        %v825 = vpack.c.b16 %v793, %v793
        %v826 = vpack.c.b16 %v794, %v794
        %v827 = vpack.c.b16 %v795, %v795
        %v828 = vpack.c.b16 %v796, %v796
        %v829 = vpack.c.b16 %v797, %v797
        %862 = vst [vmem:[%s241] sm:$0xf] %v798
        %863 = vst [vmem:[%s241 + $0x4] sm:$0xf] %v799
        %864 = vst [vmem:[%s241 + $0x8] sm:$0xf] %v800
        %865 = vst [vmem:[%s241 + $0xc] sm:$0xf] %v801
        %866 = vst [vmem:[%s241 + $0x10] sm:$0xf] %v802
        %867 = vst [vmem:[%s241 + $0x14] sm:$0xf] %v803
        %868 = vst [vmem:[%s241 + $0x18] sm:$0xf] %v804
        %869 = vst [vmem:[%s241 + $0x1c] sm:$0xf] %v805
        %870 = vst [vmem:[%s241 + $0x20] sm:$0xf] %v806
        %871 = vst [vmem:[%s241 + $0x24] sm:$0xf] %v807
        %872 = vst [vmem:[%s241 + $0x28] sm:$0xf] %v808
        %873 = vst [vmem:[%s241 + $0x2c] sm:$0xf] %v809
        %874 = vst [vmem:[%s241 + $0x30] sm:$0xf] %v810
        %875 = vst [vmem:[%s241 + $0x34] sm:$0xf] %v811
        %876 = vst [vmem:[%s241 + $0x38] sm:$0xf] %v812
        %877 = vst [vmem:[%s241 + $0x3c] sm:$0xf] %v813
        %878 = vst [vmem:[%s241 + $0x40] sm:$0xf] %v814
        %879 = vst [vmem:[%s241 + $0x44] sm:$0xf] %v815
        %880 = vst [vmem:[%s241 + $0x48] sm:$0xf] %v816
        %881 = vst [vmem:[%s241 + $0x4c] sm:$0xf] %v817
        %882 = vst [vmem:[%s241 + $0x50] sm:$0xf] %v818
        %883 = vst [vmem:[%s241 + $0x54] sm:$0xf] %v819
        %884 = vst [vmem:[%s241 + $0x58] sm:$0xf] %v820
        %885 = vst [vmem:[%s241 + $0x5c] sm:$0xf] %v821
        %886 = vst [vmem:[%s241 + $0x60] sm:$0xf] %v822
        %887 = vst [vmem:[%s241 + $0x64] sm:$0xf] %v823
        %888 = vst [vmem:[%s241 + $0x68] sm:$0xf] %v824
        %889 = vst [vmem:[%s241 + $0x6c] sm:$0xf] %v825
        %890 = vst [vmem:[%s241 + $0x70] sm:$0xf] %v826
        %891 = vst [vmem:[%s241 + $0x74] sm:$0xf] %v827
        %892 = vst [vmem:[%s241 + $0x78] sm:$0xf] %v828
        %893 = vst [vmem:[%s241 + $0x7c] sm:$0xf] %v829
        %s894 = sand.u32 %s102, 1
        %s895 = scalar_lea.sflag [#allocation4], %s894
        %s896 = sand.u32 %s102, 1
        %s897 = smul.addr %s896, 256
        %s898 = scalar_lea.vmem [#allocation7], %s897
        %s899 = sand.u32 %s128, 1
        %s900 = scalar_lea.sflag [#allocation9], %s899
        %s901 = sand.u32 %s128, 1
        %s902 = smul.addr %s901, 128
        %s903 = scalar_lea.vmem [#allocation8], %s902
        // Predicated region
        $region41: #{tpu_custom_call.1} parent=31 // pred_check
          %p904 = pneg %p112
        $region42: #{tpu_custom_call.1} parent=31 // pred_check_branch
          %906 = sbr.rel (%p904) target = $region44
        $region43: #{tpu_custom_call.1} parent=31 // pred_region
          %s907 = smul.u32 32, %s26
          %s909 = ssub.s32 4096, 4096
          %910 = vsyncadd %s895, %s909
          %s911 = smul.addr %s907, 128
          %s912 = scalar_lea.hbm %s3, %s911
          %s913 = sshll.u32 %s898, 4
          %s914 = int_to_ptr.vmem [resolvable:$true] %s913
          %919 = dma.vmem_to_hbm [thread:$0]  %s914, 4096, %s912, %s895, 128, 128, 8
        $region44: #{tpu_custom_call.1} parent=31 // pred_fallthru
          _
        // Predicated region
        $region45: #{tpu_custom_call.1} parent=31 // pred_check
          %p920 = pneg %p138
        $region46: #{tpu_custom_call.1} parent=31 // pred_check_branch
          %922 = sbr.rel (%p920) target = $region48
        $region47: #{tpu_custom_call.1} parent=31 // pred_region
          %s923 = smul.u32 32, %s26
          %s925 = ssub.s32 2048, 2048
          %926 = vsyncadd %s900, %s925
          %s927 = smul.addr %s923, 64
          %s928 = scalar_lea.hbm %s4, %s927
          %s929 = sshll.u32 %s903, 4
          %s930 = int_to_ptr.vmem [resolvable:$true] %s929
          %935 = dma.vmem_to_hbm [thread:$0]  %s930, 2048, %s928, %s900, 64, 64, 4
        $region48: #{tpu_custom_call.1} parent=31 // pred_fallthru
          _
      $region32: #{tpu_custom_call.1} parent=5 // pred_fallthru
        _
      %p936 = scmp.le.s32.totalorder 2, %s21
      // Predicated region
      $region49: #{tpu_custom_call.1} parent=5 // pred_check
        %p937 = pneg %p936
      $region50: #{tpu_custom_call.1} parent=5 // pred_check_branch
        %939 = sbr.rel (%p937) target = $region52
      $region51: #{tpu_custom_call.1} parent=5 // pred_region
        %s940 = ssub.s32 %s21, 2
        // Predicated region
        $region53: #{tpu_custom_call.1} parent=51 // pred_check
          %p941 = pneg %p118
        $region54: #{tpu_custom_call.1} parent=51 // pred_check_branch
          %943 = sbr.rel (%p941) target = $region56
        $region55: #{tpu_custom_call.1} parent=51 // pred_region
          %s944 = sand.u32 %s103, 1
          %s945 = scalar_lea.sflag [#allocation4], %s944
          %s946 = sand.u32 %s103, 1
          %s947 = smul.addr %s946, 256
          %s948 = scalar_lea.vmem [#allocation7], %s947
          %949 = dma.done %s945, 4096
        $region56: #{tpu_custom_call.1} parent=51 // pred_fallthru
          _
        // Predicated region
        $region57: #{tpu_custom_call.1} parent=51 // pred_check
          %p950 = pneg %p144
        $region58: #{tpu_custom_call.1} parent=51 // pred_check_branch
          %952 = sbr.rel (%p950) target = $region60
        $region59: #{tpu_custom_call.1} parent=51 // pred_region
          %s953 = sand.u32 %s129, 1
          %s954 = scalar_lea.sflag [#allocation9], %s953
          %s955 = sand.u32 %s129, 1
          %s956 = smul.addr %s955, 128
          %s957 = scalar_lea.vmem [#allocation8], %s956
          %958 = dma.done %s954, 2048
        $region60: #{tpu_custom_call.1} parent=51 // pred_fallthru
          _
      $region52: #{tpu_custom_call.1} parent=5 // pred_fallthru
        _
    $region6: #{tpu_custom_call.1} parent=1 // loop_footer
      %s25 = sadd.s32 1, %s21
    $region7: #{tpu_custom_call.1} parent=1 // loop_footer_branch
      %20 = sbr.rel target = $region3
    $region8: #{tpu_custom_call.1} parent=1 // loop_exit
      _
    %959 = vsyncpa [#allocation3], 1
    %s960 = scalar_lea.sflag [#allocation3], 1
    %961 = vsyncpa %s960, 1
    %962 = vsyncpa [#allocation6], 1
    %963 = vsyncpa [#allocation4], 1
    %s964 = scalar_lea.sflag [#allocation4], 1
    %965 = vsyncpa %s964, 1
    %966 = vsyncpa [#allocation9], 1
    %s967 = scalar_lea.sflag [#allocation9], 1
    %968 = vsyncpa %s967, 1

</llo_original>
